<compile_context>
chip_gen: v6e
topology: v6e:2x2x1
jax: 0.10.0
libtpu: 0.0.40
codegen_flags: <defaults>
</compile_context>

<pallas_src>
import functools

import jax
import jax.numpy as jnp
from jax.experimental import pallas as pl
from jax.experimental.pallas import tpu as pltpu


def _round_up(x, m):
    return ((x + m - 1) // m) * m


def _cps_loss_kernel(outputs_ref, labels_ref, map_ref, out_ref,
                     l1_ref, acc_ref, *, a_scale, b_scale):
    pid = pl.program_id(0)
    last = pl.num_programs(0) - 1

    # ---- step 0: init accumulator and compute cross-entropy (sum of NLL) ----
    @pl.when(pid == 0)
    def _init_and_ce():
        acc_ref[...] = jnp.zeros_like(acc_ref)

        logits = outputs_ref[...].astype(jnp.float32)        # (N, C)
        labels = labels_ref[...]                              # (N, 1) int32
        n, c = logits.shape

        # numerically stable log-softmax
        m = jnp.max(logits, axis=-1, keepdims=True)            # (N, 1)
        shifted = logits - m                                    # (N, C)
        lse = jnp.log(jnp.sum(jnp.exp(shifted), axis=-1, keepdims=True))

        # gather logit at the target class via one-hot mask
        class_ids = jax.lax.broadcasted_iota(jnp.int32, (n, c), 1)
        onehot = class_ids == labels                            # (N, C) bool
        picked = jnp.sum(jnp.where(onehot, shifted, 0.0),
                         axis=-1, keepdims=True)                # (N, 1)

        nll = lse - picked                                      # (N, 1)
        l1_ref[...] = jnp.sum(nll, keepdims=True)               # (1, 1) sum

    # ---- every step: accumulate the lane-dense map tile (cast in-kernel) ----
    acc_ref[...] += jnp.sum(map_ref[...].astype(jnp.float32), keepdims=True)

    # ---- last step: combine with folded scales, single write to the output ---
    @pl.when(pid == last)
    def _finalize():
        out_ref[...] = a_scale * l1_ref[...] + b_scale * acc_ref[...]


def cps_loss(outputs, labels, map_target, *, alpha, beta, input_size,
             lane=512, max_tile_rows=512):
    """outputs: (N, C) float; labels: (N,) int; map_target: any shape/dtype."""
    n, c = outputs.shape
    labels2d = labels.astype(jnp.int32).reshape(n, 1)

    # Lane-dense, native-dtype map layout: flatten and zero-pad to
    # (num_tiles * tile_rows, lane).  Zero padding does not change the sum.
    flat = map_target.reshape(-1)
    total = int(flat.shape[0])
    rows = -(-total // lane)
    tile_rows = min(max_tile_rows, _round_up(rows, 8))
    num_tiles = -(-rows // tile_rows)
    padded_rows = num_tiles * tile_rows
    pad = padded_rows * lane - total
    if pad:
        flat = jnp.pad(flat, (0, pad))
    map2d = flat.reshape(padded_rows, lane)

    # Fold the scalar divisions into compile-time constants.
    denom = input_size * input_size / 2.0
    a_scale = float(alpha) / float(n)
    b_scale = float(beta) / float(denom)

    kernel = functools.partial(
        _cps_loss_kernel, a_scale=a_scale, b_scale=b_scale)

    bytes_accessed = (outputs.size * outputs.dtype.itemsize
                      + n * 4
                      + map2d.size * map2d.dtype.itemsize
                      + 4)
    cost = pl.CostEstimate(
        flops=int(5 * n * c + map2d.size),
        transcendentals=int(n * c),
        bytes_accessed=int(bytes_accessed))

    out = pl.pallas_call(
        kernel,
        out_shape=jax.ShapeDtypeStruct((1, 1), jnp.float32),
        grid_spec=pltpu.PrefetchScalarGridSpec(
            num_scalar_prefetch=0,
            grid=(num_tiles,),
            in_specs=[
                # logits/labels: one resident block (constant block index);
                # only re-tile over N if N*C outgrows VMEM.
                pl.BlockSpec((n, c), lambda i: (0, 0)),
                pl.BlockSpec((n, 1), lambda i: (0, 0)),
                # map: lane-dense row tiles streamed over the reduction axis.
                pl.BlockSpec((tile_rows, lane), lambda i: (i, 0)),
            ],
            out_specs=pl.BlockSpec((1, 1), lambda i: (0, 0)),
            scratch_shapes=[
                pltpu.VMEM((1, 1), jnp.float32),   # l1 (sum of NLL)
                pltpu.VMEM((1, 1), jnp.float32),   # map-sum accumulator
            ]),
        compiler_params=pltpu.CompilerParams(
            dimension_semantics=("arbitrary",)),
        cost_estimate=cost,
    )(outputs, labels2d, map2d)
    return out[0, 0]


def _reference(outputs, labels, map_target, alpha, beta, input_size):
    # pure-JAX reference for sanity check
    logits = outputs.astype(jnp.float32)
    logp = jax.nn.log_softmax(logits, axis=-1)
    l1 = -jnp.mean(jnp.take_along_axis(logp, labels[:, None], axis=-1))
    l2 = jnp.sum(map_target.astype(jnp.float32)) / (input_size * input_size / 2.0)
    return alpha * l1 + beta * l2


if __name__ == "__main__":
    key = jax.random.PRNGKey(0)
    k1, k2, k3 = jax.random.split(key, 3)

    N, C = 8, 4          # batch, num classes
    INPUT_SIZE = 16
    ALPHA, BETA = 1.0, 0.5

    outputs = jax.random.normal(k1, (N, C), dtype=jnp.float32)
    labels = jax.random.randint(k2, (N,), 0, C, dtype=jnp.int32)
    # map_target like an NCHW attention/saliency map: (N, 1, H, W)
    map_target = jax.random.uniform(k3, (N, 1, INPUT_SIZE, INPUT_SIZE),
                                    dtype=jnp.float32)

    ref = _reference(outputs, labels, map_target, ALPHA, BETA, INPUT_SIZE)

    # 1) default lane-dense tiling (single grid step at this toy size)
    loss = cps_loss(outputs, labels, map_target,
                    alpha=ALPHA, beta=BETA, input_size=INPUT_SIZE)
    loss = jax.block_until_ready(loss)
    assert jnp.allclose(loss, ref, rtol=1e-5, atol=1e-5), (loss, ref)

    # 2) force multiple grid steps to exercise the accumulator path
    loss_tiled = cps_loss(outputs, labels, map_target,
                          alpha=ALPHA, beta=BETA, input_size=INPUT_SIZE,
                          lane=128, max_tile_rows=8)
    loss_tiled = jax.block_until_ready(loss_tiled)
    assert jnp.allclose(loss_tiled, ref, rtol=1e-5, atol=1e-5), (loss_tiled, ref)

    print("KERNEL_OK")
</pallas_src>

<mosaic_0001>
module attributes {stable_mosaic.version = 11 : i64} {
  func.func @_cps_loss_kernel(%arg0: i32, %arg1: memref<8x4xf32, #tpu.memory_space<vmem>>, %arg2: memref<8x1xi32, #tpu.memory_space<vmem>>, %arg3: memref<8x512xf32, #tpu.memory_space<vmem>>, %arg4: memref<1x1xf32, #tpu.memory_space<vmem>>, %arg5: memref<1x1xf32, #tpu.memory_space<vmem>>, %arg6: memref<1x1xf32, #tpu.memory_space<vmem>>) attributes {dimension_semantics = [#tpu.dimension_semantics<arbitrary>], iteration_bounds = array<i64: 1>, scalar_prefetch = 0 : i64, scratch_operands = 2 : i64, tpu.core_type = #tpu.core_type<tc>, window_params = [{pipeline_mode = #tpu.pipeline_mode<synchronous>, transform_indices = @transform_0, window_bounds = array<i64: 8, 4>}, {pipeline_mode = #tpu.pipeline_mode<synchronous>, transform_indices = @transform_1, window_bounds = array<i64: 8, 1>}, {transform_indices = @transform_2, window_bounds = array<i64: 8, 512>}, {pipeline_mode = #tpu.pipeline_mode<synchronous>, transform_indices = @transform_3, window_bounds = array<i64: 1, 1>}]} {
    %c0_i32 = arith.constant 0 : i32
    %0 = arith.cmpi eq, %arg0, %c0_i32 : i32
    %1 = arith.extui %0 : i1 to i32
    %c0_i32_0 = arith.constant 0 : i32
    %2 = arith.cmpi ne, %1, %c0_i32_0 : i32
    scf.if %2 {
      %cst_8 = arith.constant 0.000000e+00 : f32
      %15 = vector.broadcast %cst_8 : f32 to vector<1x1xf32>
      %c0_9 = arith.constant 0 : index
      %c0_10 = arith.constant 0 : index
      %16 = vector.load %arg6[%c0_9, %c0_10] : memref<1x1xf32, #tpu.memory_space<vmem>>, vector<1x1xf32>
      tpu.vector_store %arg6[%c0_9, %c0_10], %15 {strides = array<i32>} : memref<1x1xf32, #tpu.memory_space<vmem>>, vector<1x1xf32>,
      %c0_11 = arith.constant 0 : index
      %c0_12 = arith.constant 0 : index
      %17 = vector.load %arg1[%c0_11, %c0_12] : memref<8x4xf32, #tpu.memory_space<vmem>>, vector<8x4xf32>
      %c0_13 = arith.constant 0 : index
      %c0_14 = arith.constant 0 : index
      %18 = vector.load %arg2[%c0_13, %c0_14] : memref<8x1xi32, #tpu.memory_space<vmem>>, vector<8x1xi32>
      %cst_15 = arith.constant dense<0xFF800000> : vector<8xf32>
      %19 = vector.multi_reduction <maximumf>, %17, %cst_15 [1] : vector<8x4xf32> to vector<8xf32>
      %20 = vector.shape_cast %19 : vector<8xf32> to vector<8x1xf32>
      %21 = vector.broadcast %20 : vector<8x1xf32> to vector<8x4xf32>
      %22 = arith.subf %17, %21 : vector<8x4xf32>
      %23 = math.exp %22 : vector<8x4xf32>
      %cst_16 = arith.constant dense<0.000000e+00> : vector<8xf32>
      %24 = vector.multi_reduction <add>, %23, %cst_16 [1] : vector<8x4xf32> to vector<8xf32>
      %25 = vector.shape_cast %24 : vector<8xf32> to vector<8x1xf32>
      %26 = math.log %25 : vector<8x1xf32>
      %27 = tpu.iota {dimensions = array<i32: 1>} : vector<8x4xi32>
      %28 = vector.broadcast %18 : vector<8x1xi32> to vector<8x4xi32>
      %29 = arith.cmpi eq, %27, %28 : vector<8x4xi32>
      %cst_17 = arith.constant 0.000000e+00 : f32
      %30 = vector.broadcast %cst_17 : f32 to vector<8x4xf32>
      %31 = arith.select %29, %22, %30 : vector<8x4xi1>, vector<8x4xf32>
      %cst_18 = arith.constant dense<0.000000e+00> : vector<8xf32>
      %32 = vector.multi_reduction <add>, %31, %cst_18 [1] : vector<8x4xf32> to vector<8xf32>
      %33 = vector.shape_cast %32 : vector<8xf32> to vector<8x1xf32>
      %34 = arith.subf %26, %33 : vector<8x1xf32>
      %35 = vector.shape_cast %34 : vector<8x1xf32> to vector<1x8x1xf32>
      %cst_19 = arith.constant dense<0.000000e+00> : vector<1xf32>
      %36 = vector.multi_reduction <add>, %35, %cst_19 [1, 2] : vector<1x8x1xf32> to vector<1xf32>
      %37 = vector.shape_cast %36 : vector<1xf32> to vector<1x1x1xf32>
      %38 = vector.extract %37[0, 0, 0] : f32 from vector<1x1x1xf32>
      %39 = vector.broadcast %38 : f32 to vector<1x1xf32>
      %c0_20 = arith.constant 0 : index
      %c0_21 = arith.constant 0 : index
      %40 = vector.load %arg5[%c0_20, %c0_21] : memref<1x1xf32, #tpu.memory_space<vmem>>, vector<1x1xf32>
      tpu.vector_store %arg5[%c0_20, %c0_21], %39 {strides = array<i32>} : memref<1x1xf32, #tpu.memory_space<vmem>>, vector<1x1xf32>,
    } else {
    }
    %c0 = arith.constant 0 : index
    %c0_1 = arith.constant 0 : index
    %3 = vector.load %arg6[%c0, %c0_1] : memref<1x1xf32, #tpu.memory_space<vmem>>, vector<1x1xf32>
    %c0_2 = arith.constant 0 : index
    %c0_3 = arith.constant 0 : index
    %4 = vector.load %arg3[%c0_2, %c0_3] : memref<8x512xf32, #tpu.memory_space<vmem>>, vector<8x512xf32>
    %5 = vector.shape_cast %4 : vector<8x512xf32> to vector<1x8x512xf32>
    %cst = arith.constant dense<0.000000e+00> : vector<1xf32>
    %6 = vector.multi_reduction <add>, %5, %cst [1, 2] : vector<1x8x512xf32> to vector<1xf32>
    %7 = vector.shape_cast %6 : vector<1xf32> to vector<1x1x1xf32>
    %8 = vector.extract %7[0, 0, 0] : f32 from vector<1x1x1xf32>
    %9 = vector.broadcast %8 : f32 to vector<1x1xf32>
    %10 = arith.addf %3, %9 : vector<1x1xf32>
    %c0_4 = arith.constant 0 : index
    %c0_5 = arith.constant 0 : index
    %11 = vector.load %arg6[%c0_4, %c0_5] : memref<1x1xf32, #tpu.memory_space<vmem>>, vector<1x1xf32>
    tpu.vector_store %arg6[%c0_4, %c0_5], %10 {strides = array<i32>} : memref<1x1xf32, #tpu.memory_space<vmem>>, vector<1x1xf32>,
    %c0_i32_6 = arith.constant 0 : i32
    %12 = arith.cmpi eq, %arg0, %c0_i32_6 : i32
    %13 = arith.extui %12 : i1 to i32
    %c0_i32_7 = arith.constant 0 : i32
    %14 = arith.cmpi ne, %13, %c0_i32_7 : i32
    scf.if %14 {
      %c0_8 = arith.constant 0 : index
      %c0_9 = arith.constant 0 : index
      %15 = vector.load %arg5[%c0_8, %c0_9] : memref<1x1xf32, #tpu.memory_space<vmem>>, vector<1x1xf32>
      %cst_10 = arith.constant 1.250000e-01 : f32
      %16 = vector.broadcast %cst_10 : f32 to vector<1x1xf32>
      %17 = arith.mulf %16, %15 : vector<1x1xf32>
      %c0_11 = arith.constant 0 : index
      %c0_12 = arith.constant 0 : index
      %18 = vector.load %arg6[%c0_11, %c0_12] : memref<1x1xf32, #tpu.memory_space<vmem>>, vector<1x1xf32>
      %cst_13 = arith.constant 3.906250e-03 : f32
      %19 = vector.broadcast %cst_13 : f32 to vector<1x1xf32>
      %20 = arith.mulf %19, %18 : vector<1x1xf32>
      %21 = arith.addf %17, %20 : vector<1x1xf32>
      %c0_14 = arith.constant 0 : index
      %c0_15 = arith.constant 0 : index
      %22 = vector.load %arg4[%c0_14, %c0_15] : memref<1x1xf32, #tpu.memory_space<vmem>>, vector<1x1xf32>
      tpu.vector_store %arg4[%c0_14, %c0_15], %21 {strides = array<i32>} : memref<1x1xf32, #tpu.memory_space<vmem>>, vector<1x1xf32>,
    } else {
    }
    return
  }
  func.func @transform_0(%arg0: i32) -> (i32, i32) {
    %c0_i32 = arith.constant 0 : i32
    %c0_i32_0 = arith.constant 0 : i32
    %c0_i32_1 = arith.constant 0 : i32
    return %c0_i32, %c0_i32_0 : i32, i32
  }
  func.func @transform_1(%arg0: i32) -> (i32, i32) {
    %c0_i32 = arith.constant 0 : i32
    %c0_i32_0 = arith.constant 0 : i32
    %c0_i32_1 = arith.constant 0 : i32
    return %c0_i32, %c0_i32_0 : i32, i32
  }
  func.func @transform_2(%arg0: i32) -> (i32, i32) {
    %c0_i32 = arith.constant 0 : i32
    %c0_i32_0 = arith.constant 0 : i32
    return %arg0, %c0_i32 : i32, i32
  }
  func.func @transform_3(%arg0: i32) -> (i32, i32) {
    %c0_i32 = arith.constant 0 : i32
    %c0_i32_0 = arith.constant 0 : i32
    %c0_i32_1 = arith.constant 0 : i32
    return %c0_i32, %c0_i32_0 : i32, i32
  }
}

</mosaic_0001>

<llo_original>
// kernel: tpu_custom_call.1
$region0: #{tpu_custom_call.1}
  #allocation0 [shape = 'u32[]', space=smem, size = 0x4, offset = 0x4, fixed_abs, tag = 'smem constant byte address 0x4 - core index']
  #allocation1 [shape = 'u32[144,128]{1,0:T(1,128)}', space=vmem, size = 0x12000, scoped, tag = 'internal scratch']
  #allocation2 [shape = 'f32[1,1]{1,0:T(1,128)}', space=vmem, size = 0x200, scoped, tag = 'scratch operand']
  #allocation3 [shape = 'f32[1,1]{1,0:T(1,128)}', space=vmem, size = 0x200, scoped, tag = 'scratch operand']
  %s0 = inlined_call_operand.vmem [shape: f32[8,4], index: 0, kind: input, shape index: {}]
  %s1 = inlined_call_operand.vmem [shape: s32[8,1], index: 1, kind: input, shape index: {}]
  %s2 = inlined_call_operand.hbm [shape: f32[8,512], index: 2, kind: input, shape index: {}]
  %s3 = inlined_call_operand.hbm [shape: f32[1,1], index: 3, kind: output, shape index: {}]
  %s4 = sld [smem:[#allocation0]]
  $region34: #{tpu_custom_call.1} parent=0
    _
  %s6 = ssub.s32 1, %s4
  %s7 = scalar_select 0, %s6, %s4
  $region1: #{tpu_custom_call.1} parent=0
    #allocation4 [shape = 'u8[16384]{0}', space=vmem, size = 0x4000, scoped, tag = 'input window, operand 2, single buffered']
    #allocation5 [shape = 's32[1]{0}', space=sflag, size = 0x4, scoped, tag = 'scoped memory for tpu_custom_call.1']
    #allocation6 [shape = 's32[1]{0}', space=sflag, size = 0x4, scoped, tag = 'scoped memory for tpu_custom_call.1']
    #allocation7 [shape = 'u8[512]{0}', space=vmem, size = 0x400, scoped, tag = 'output window, operand 0, single buffered']
    %8 = vsyncpa [#allocation5], 0
    %9 = vsyncpa [#allocation6], 0
    // Predicated region
    $region2: #{tpu_custom_call.1} parent=1 // pred_check
      _
    $region3: #{tpu_custom_call.1} parent=1 // pred_check_branch
      %11 = sbr.rel (0) target = $region5
    $region4: #{tpu_custom_call.1} parent=1 // pred_region
      _
    $region5: #{tpu_custom_call.1} parent=1 // pred_fallthru
      _
    // Predicated region
    $region6: #{tpu_custom_call.1} parent=1 // pred_check
      _
    $region7: #{tpu_custom_call.1} parent=1 // pred_check_branch
      %13 = sbr.rel (0) target = $region9
    $region8: #{tpu_custom_call.1} parent=1 // pred_region
      _
    $region9: #{tpu_custom_call.1} parent=1 // pred_fallthru
      _
    // Predicated region
    $region10: #{tpu_custom_call.1} parent=1 // pred_check
      _
    $region11: #{tpu_custom_call.1} parent=1 // pred_check_branch
      %15 = sbr.rel (0) target = $region13
    $region12: #{tpu_custom_call.1} parent=1 // pred_region
      %s17 = ssub.s32 512, 512
      %18 = vsyncadd [#allocation5], %s17
      %s20 = sshll.u32 [#allocation4], 4
      %s21 = int_to_ptr.vmem [resolvable:$true] %s20
      %23 = dma.hbm_to_vmem [thread:$0]  %s2, 512, %s21, [#allocation5]
    $region13: #{tpu_custom_call.1} parent=1 // pred_fallthru
      _
    // Predicated region
    $region14: #{tpu_custom_call.1} parent=1 // pred_check
      _
    $region15: #{tpu_custom_call.1} parent=1 // pred_check_branch
      %25 = sbr.rel (0) target = $region17
    $region16: #{tpu_custom_call.1} parent=1 // pred_region
      %26 = dma.done [#allocation5], 512
    $region17: #{tpu_custom_call.1} parent=1 // pred_fallthru
      _
    %p27 = scmp.eq.s32.totalorder 0, 0
    // Predicated region
    $region18: #{tpu_custom_call.1} parent=1 // pred_check
      %p28 = pneg %p27
    $region19: #{tpu_custom_call.1} parent=1 // pred_check_branch
      %30 = sbr.rel (%p28) target = $region21
    $region20: #{tpu_custom_call.1} parent=1 // pred_region
      %vm31 = vcmask 0
      %32 = vst.msk [vmem:[#allocation3] sm:$0x1] %vm31, 0.0
      %v33 = vld [vmem:[%s0] sm:$0xff]
      %v34 = vld [vmem:[%s1] sm:$0xff]
      %vm35 = vcmask 31744
      %v36 = vsel %vm35, %v33, -inf
      %37 = vmax.xlane.f32.xlu0 %v36
      %v38 = vpop.xlane.xlu0 %37
      %v39 = vsub.f32 %v33, %v38
      %v40 = vmul.f32 %v39, 1.442695
      %v41 = vpow.pop %v40
      %v42 = vsel %vm35, %v41, 0.0
      %43 = vadd.xlane.f32.xlu0 %v42
      %v44 = vpop.xlane.xlu0 %43
      %v45 = vlog2.pop %v44
      %v46 = vmul.f32 %v45, 0.6931472
      %v47 = vlaneseq
      %v48 = vand.u32 %v47, 127
      %49 = vset.pattern.permute.xlu0 0
      %50 = vperm.xlu0 %49, %v34
      %v51 = vpop.permute.xlu0 %50
      %vm52 = vcmp.eq.s32.totalorder %v48, %v51
      %v53 = vsel %vm52, %v39, 0.0
      %v54 = vsel %vm35, %v53, 0.0
      %55 = vadd.xlane.f32.xlu0 %v54
      %v56 = vpop.xlane.xlu0 %55
      %v57 = vsub.f32 %v46, %v56
      %vm58 = vcmask 7168
      %v59 = vsel %vm58, %v57, 0.0
      %60 = vadd.xlane.f32.xlu0 %v59
      %v61 = vpop.xlane.xlu0 %60
      %v62 = vrot.slane %v61, 4
      %v63 = vadd.f32 %v61, %v62
      %v64 = vrot.slane %v63, 2
      %v65 = vadd.f32 %v63, %v64
      %v66 = vrot.slane %v65, 1
      %v67 = vadd.f32 %v65, %v66
      %s68 = vtos %v67
      %v69 = vstv %s68
      %70 = vst.msk [vmem:[#allocation2] sm:$0x1] %vm31, %v69
    $region21: #{tpu_custom_call.1} parent=1 // pred_fallthru
      _
    %v71 = vld [vmem:[#allocation3] sm:$0x1]
    %v72 = vld [vmem:[#allocation4] sm:$0xff]
    %v73 = vld [vmem:[#allocation4 + $0x8] sm:$0xff]
    %v74 = vld [vmem:[#allocation4 + $0x10] sm:$0xff]
    %v75 = vld [vmem:[#allocation4 + $0x18] sm:$0xff]
    %v76 = vadd.f32 %v72, %v73
    %v77 = vadd.f32 %v76, %v74
    %v78 = vadd.f32 %v77, %v75
    %79 = vadd.xlane.f32.xlu0 %v78
    %v80 = vpop.xlane.xlu0 %79
    %v81 = vrot.slane %v80, 4
    %v82 = vadd.f32 %v80, %v81
    %v83 = vrot.slane %v82, 2
    %v84 = vadd.f32 %v82, %v83
    %v85 = vrot.slane %v84, 1
    %v86 = vadd.f32 %v84, %v85
    %s87 = vtos %v86
    %v88 = vstv %s87
    %v89 = vadd.f32 %v71, %v88
    %vm90 = vcmask 0
    %91 = vst.msk [vmem:[#allocation3] sm:$0x1] %vm90, %v89
    // Predicated region
    $region22: #{tpu_custom_call.1} parent=1 // pred_check
      %p92 = pneg %p27
    $region23: #{tpu_custom_call.1} parent=1 // pred_check_branch
      %94 = sbr.rel (%p92) target = $region25
    $region24: #{tpu_custom_call.1} parent=1 // pred_region
      %v95 = vld [vmem:[#allocation2] sm:$0x1]
      %v96 = vmul.f32 %v95, 0.125
      %v97 = vld [vmem:[#allocation3] sm:$0x1]
      %v98 = vmul.f32 %v97, 0.00390625
      %v99 = vadd.f32 %v96, %v98
      %100 = vst.msk [vmem:[#allocation7] sm:$0x1] %vm90, %v99
    $region25: #{tpu_custom_call.1} parent=1 // pred_fallthru
      _
    // Predicated region
    $region26: #{tpu_custom_call.1} parent=1 // pred_check
      _
    $region27: #{tpu_custom_call.1} parent=1 // pred_check_branch
      %102 = sbr.rel (0) target = $region29
    $region28: #{tpu_custom_call.1} parent=1 // pred_region
      %s104 = ssub.s32 16, 16
      %105 = vsyncadd [#allocation6], %s104
      %s107 = sshll.u32 [#allocation7], 4
      %s108 = int_to_ptr.vmem [resolvable:$true] %s107
      %110 = dma.vmem_to_hbm [thread:$0]  %s108, 16, %s3, [#allocation6]
    $region29: #{tpu_custom_call.1} parent=1 // pred_fallthru
      _
    // Predicated region
    $region30: #{tpu_custom_call.1} parent=1 // pred_check
      _
    $region31: #{tpu_custom_call.1} parent=1 // pred_check_branch
      %112 = sbr.rel (0) target = $region33
    $region32: #{tpu_custom_call.1} parent=1 // pred_region
      %113 = dma.done [#allocation6], 16
    $region33: #{tpu_custom_call.1} parent=1 // pred_fallthru
      _
    %114 = vsyncpa [#allocation5], 1
    %115 = vsyncpa [#allocation6], 1

</llo_original>
